<compile_context>
chip_gen: v7x
topology: tpu7x:2x2x1
jax: 0.10.0
libtpu: 0.0.40
codegen_flags: <defaults>
</compile_context>

<pallas_src>
import math

import jax
import jax.numpy as jnp
from jax.experimental import pallas as pl
from jax.experimental.pallas import tpu as pltpu


def pe_add_kernel(x_ref, pe_ref, o_ref):
    # (tile_rows, L) + (1, L) sublane-broadcast add. Pure VPU filler; DMA-bound.
    o_ref[...] = x_ref[...] + pe_ref[...]


def make_pe_table(d_model, max_len=5000, dtype=jnp.float32):
    """Deterministic sinusoidal table, identical to the module's __init__."""
    position = jnp.arange(max_len, dtype=jnp.float32)[:, None]            # (L, 1)
    div_term = jnp.exp(
        jnp.arange(0, d_model, 2, dtype=jnp.float32)
        * (-math.log(10000.0) / d_model)
    )                                                                     # (ceil(D/2),)
    angles = position * div_term                                          # (L, ceil(D/2))
    pe = jnp.zeros((max_len, d_model), dtype=jnp.float32)
    pe = pe.at[:, 0::2].set(jnp.sin(angles))
    # cos slots: floor(D/2) columns (PyTorch original errors for odd d_model;
    # here we just drop the surplus angle column so odd D works too).
    pe = pe.at[:, 1::2].set(jnp.cos(angles[:, : d_model // 2]))
    return pe.astype(dtype)                                               # (L, D)


def _vmem_limit_bytes():
    """Per-generation scoped-VMEM limit: 3/4 of physical, capped at 64 MiB.

    v5e/v6e (128 MiB physical) -> 64 MiB; v7x (64 MiB per TC) -> 48 MiB.
    Falls back to a universally safe 32 MiB if the query is unavailable.
    """
    try:
        info = pltpu.get_tpu_info()
        phys = int(getattr(info, "vmem_capacity_bytes", 0))
        if phys > 0:
            return min((phys * 3) // 4, 64 * 1024 * 1024)
    except Exception:
        pass
    return 32 * 1024 * 1024


def _pallas_broadcast_add(x2, pe2, tile_rows, vmem_limit):
    """(N, L) + (1, L) broadcast add via pallas_call, CORE_PARALLEL preferred."""
    N, L = x2.shape

    def build(sem):
        return pl.pallas_call(
            pe_add_kernel,
            out_shape=jax.ShapeDtypeStruct((N, L), x2.dtype),
            grid=(pl.cdiv(N, tile_rows),),
            in_specs=[
                pl.BlockSpec((tile_rows, L), lambda i: (i, 0)),
                pl.BlockSpec((1, L), lambda i: (0, 0)),   # constant -> VMEM resident
            ],
            out_specs=pl.BlockSpec((tile_rows, L), lambda i: (i, 0)),
            compiler_params=pltpu.CompilerParams(
                dimension_semantics=(sem,),
                vmem_limit_bytes=vmem_limit,
            ),
        )

    try:
        # Splits the row grid across both TensorCores on v7x (no-op on 1-TC chips).
        return build(pltpu.CORE_PARALLEL)(x2, pe2)
    except Exception:
        # Older/mock backends that reject core-parallel semantics.
        return build(pltpu.PARALLEL)(x2, pe2)


def positional_encoding_forward(x, pe_table, dropout_p=0.0):
    """x: (seq_len, batch, d_model). Returns x + pe_table[batch % max_len]."""
    if dropout_p > 0.0:
        # TODO(synk): dropout with p > 0 not implemented (would need in-kernel
        # pltpu.prng_seed / pltpu.prng_random_bits); module default p=0 is identity.
        raise NotImplementedError("dropout_p > 0 is not implemented")

    S, B, D = x.shape
    max_len = pe_table.shape[0]
    # PyTorch: temp = pe.repeat(S,1,1) has S*max_len rows -> temp[B] = pe[B % max_len],
    # IndexError only when B >= S*max_len.
    if B >= S * max_len:
        raise IndexError(
            f"batch size {B} out of range for repeated pe table ({S * max_len} rows)"
        )
    pe_row = pe_table[B % max_len].astype(x.dtype)                        # (D,)

    # ---- layout plumbing: lane-dense (rows, L) slab, L a multiple of 128 ---
    total = S * B * D
    if D % 128 == 0:
        L = D
    else:
        L = (D * 128) // math.gcd(D, 128)                                 # lcm(D, 128)
    n_full = total // L                                                   # bulk rows
    rem = total - n_full * L                                              # < L tail elems

    xf = x.reshape(-1)
    # Each slab row is L//D consecutive d_model chunks -> tile pe to width L.
    pe2 = jnp.tile(pe_row, L // D)[None, :]                               # (1, L)

    out_bulk = None
    if n_full > 0:
        x2 = (xf if rem == 0 else xf[: n_full * L]).reshape(n_full, L)

        # ---- tile sizing: per-gen VMEM budget, dtype-aware sublane multiple -
        itemsize = jnp.dtype(x.dtype).itemsize
        row_mult = max(8, 32 // itemsize)           # 8 f32, 16 bf16, 32 int8/fp8
        vmem_limit = _vmem_limit_bytes()
        budget_bytes = max(1 * 1024 * 1024, vmem_limit // 8)   # ~4-8 MiB per tile
        rows_budget = max(
            row_mult, (budget_bytes // (L * itemsize)) // row_mult * row_mult
        )
        if n_full <= row_mult:
            tile_rows = n_full                      # full dim; single block
        else:
            # Keep >= 2 grid blocks so both v7x cores get work; stay in budget.
            half = ((n_full + 1) // 2 + row_mult - 1) // row_mult * row_mult
            tile_rows = min(rows_budget, half)

        out_bulk = _pallas_broadcast_add(x2, pe2, tile_rows, vmem_limit).reshape(-1)

    if rem > 0:
        # Tail starts on a D boundary (L % D == 0), so the pe phase is aligned.
        tail = (xf[n_full * L:].reshape(rem // D, D) + pe_row[None, :]).reshape(-1)
        out_flat = tail if out_bulk is None else jnp.concatenate([out_bulk, tail])
    else:
        out_flat = out_bulk

    return out_flat.reshape(S, B, D)


if __name__ == "__main__":
    key = jax.random.PRNGKey(0)
    S, B, D = 8, 2, 32                       # seq_len, batch, d_model
    x = jax.random.normal(key, (S, B, D), dtype=jnp.float32)

    pe_table = make_pe_table(D, max_len=64)  # small max_len; only row B is used

    out = positional_encoding_forward(x, pe_table)
    jax.block_until_ready(out)

    # Plain-JAX reference matching the PyTorch forward exactly.
    ref = x + pe_table[B % pe_table.shape[0]][None, None, :]
    assert out.shape == (S, B, D)
    assert out.dtype == x.dtype
    assert jnp.allclose(out, ref, atol=1e-6), "mismatch vs reference"

    print("KERNEL_OK")
</pallas_src>

<mosaic_0001>
module attributes {stable_mosaic.version = 11 : i64} {
  func.func @pe_add_kernel(%arg0: i32, %arg1: memref<4x128xf32, #tpu.memory_space<vmem>>, %arg2: memref<1x128xf32, #tpu.memory_space<vmem>>, %arg3: memref<4x128xf32, #tpu.memory_space<vmem>>) attributes {dimension_semantics = [#tpu.dimension_semantics<core_parallel>], iteration_bounds = array<i64: 1>, scalar_prefetch = 0 : i64, scratch_operands = 0 : i64, tpu.core_type = #tpu.core_type<tc>, window_params = [{transform_indices = @transform_0, window_bounds = array<i64: 4, 128>}, {pipeline_mode = #tpu.pipeline_mode<synchronous>, transform_indices = @transform_1, window_bounds = array<i64: 1, 128>}, {transform_indices = @transform_2, window_bounds = array<i64: 4, 128>}]} {
    %c0 = arith.constant 0 : index
    %c0_0 = arith.constant 0 : index
    %0 = vector.load %arg1[%c0, %c0_0] : memref<4x128xf32, #tpu.memory_space<vmem>>, vector<4x128xf32>
    %c0_1 = arith.constant 0 : index
    %c0_2 = arith.constant 0 : index
    %1 = vector.load %arg2[%c0_1, %c0_2] : memref<1x128xf32, #tpu.memory_space<vmem>>, vector<1x128xf32>
    %2 = vector.broadcast %1 : vector<1x128xf32> to vector<4x128xf32>
    %3 = arith.addf %0, %2 : vector<4x128xf32>
    %c0_3 = arith.constant 0 : index
    %c0_4 = arith.constant 0 : index
    %4 = vector.load %arg3[%c0_3, %c0_4] : memref<4x128xf32, #tpu.memory_space<vmem>>, vector<4x128xf32>
    tpu.vector_store %arg3[%c0_3, %c0_4], %3 {strides = array<i32>} : memref<4x128xf32, #tpu.memory_space<vmem>>, vector<4x128xf32>,
    return
  }
  func.func @transform_0(%arg0: i32) -> (i32, i32) {
    %c0_i32 = arith.constant 0 : i32
    %c0_i32_0 = arith.constant 0 : i32
    return %arg0, %c0_i32 : i32, i32
  }
  func.func @transform_1(%arg0: i32) -> (i32, i32) {
    %c0_i32 = arith.constant 0 : i32
    %c0_i32_0 = arith.constant 0 : i32
    %c0_i32_1 = arith.constant 0 : i32
    return %c0_i32, %c0_i32_0 : i32, i32
  }
  func.func @transform_2(%arg0: i32) -> (i32, i32) {
    %c0_i32 = arith.constant 0 : i32
    %c0_i32_0 = arith.constant 0 : i32
    return %arg0, %c0_i32 : i32, i32
  }
}

module attributes {stable_mosaic.version = 11 : i64} {
  func.func @pe_add_kernel(%arg0: i32, %arg1: memref<4x128xf32, #tpu.memory_space<vmem>>, %arg2: memref<1x128xf32, #tpu.memory_space<vmem>>, %arg3: memref<4x128xf32, #tpu.memory_space<vmem>>) attributes {dimension_semantics = [#tpu.dimension_semantics<parallel>], iteration_bounds = array<i64: 1>, scalar_prefetch = 0 : i64, scratch_operands = 0 : i64, tpu.core_type = #tpu.core_type<tc>, window_params = [{transform_indices = @transform_0, window_bounds = array<i64: 4, 128>}, {pipeline_mode = #tpu.pipeline_mode<synchronous>, transform_indices = @transform_1, window_bounds = array<i64: 1, 128>}, {transform_indices = @transform_2, window_bounds = array<i64: 4, 128>}]} {
    %c0 = arith.constant 0 : index
    %c0_0 = arith.constant 0 : index
    %0 = vector.load %arg1[%c0, %c0_0] : memref<4x128xf32, #tpu.memory_space<vmem>>, vector<4x128xf32>
    %c0_1 = arith.constant 0 : index
    %c0_2 = arith.constant 0 : index
    %1 = vector.load %arg2[%c0_1, %c0_2] : memref<1x128xf32, #tpu.memory_space<vmem>>, vector<1x128xf32>
    %2 = vector.broadcast %1 : vector<1x128xf32> to vector<4x128xf32>
    %3 = arith.addf %0, %2 : vector<4x128xf32>
    %c0_3 = arith.constant 0 : index
    %c0_4 = arith.constant 0 : index
    %4 = vector.load %arg3[%c0_3, %c0_4] : memref<4x128xf32, #tpu.memory_space<vmem>>, vector<4x128xf32>
    tpu.vector_store %arg3[%c0_3, %c0_4], %3 {strides = array<i32>} : memref<4x128xf32, #tpu.memory_space<vmem>>, vector<4x128xf32>,
    return
  }
  func.func @transform_0(%arg0: i32) -> (i32, i32) {
    %c0_i32 = arith.constant 0 : i32
    %c0_i32_0 = arith.constant 0 : i32
    return %arg0, %c0_i32 : i32, i32
  }
  func.func @transform_1(%arg0: i32) -> (i32, i32) {
    %c0_i32 = arith.constant 0 : i32
    %c0_i32_0 = arith.constant 0 : i32
    %c0_i32_1 = arith.constant 0 : i32
    return %c0_i32, %c0_i32_0 : i32, i32
  }
  func.func @transform_2(%arg0: i32) -> (i32, i32) {
    %c0_i32 = arith.constant 0 : i32
    %c0_i32_0 = arith.constant 0 : i32
    return %arg0, %c0_i32 : i32, i32
  }
}

</mosaic_0001>

<llo_original>
// kernel: tpu_custom_call.1
$region0: #{tpu_custom_call.1}
  #allocation0 [shape = 'u32[]', space=smem, size = 0x4, offset = 0x4, fixed_abs, tag = 'smem constant byte address 0x4 - core index']
  #allocation1 [shape = 'u32[144,128]{1,0:T(1,128)}', space=vmem, size = 0x12000, scoped, tag = 'internal scratch']
  %s0 = inlined_call_operand.hbm [shape: f32[4,128], index: 0, kind: input, shape index: {}]
  %s1 = inlined_call_operand.vmem [shape: f32[1,128], index: 1, kind: input, shape index: {}]
  %s2 = inlined_call_operand.hbm [shape: f32[4,128], index: 2, kind: output, shape index: {}]
  %s3 = sld [smem:[#allocation0]]
  $region22: #{tpu_custom_call.1} parent=0
    _
  %s5 = ssub.s32 1, %s3
  %s6 = scalar_select 0, %s5, %s3
  $region1: #{tpu_custom_call.1} parent=0
    #allocation2 [shape = 'u8[2048]{0}', space=vmem, size = 0x800, scoped, tag = 'input window, operand 0, single buffered']
    #allocation3 [shape = 's32[1]{0}', space=sflag, size = 0x4, scoped, tag = 'scoped memory for tpu_custom_call.1']
    #allocation4 [shape = 's32[1]{0}', space=sflag, size = 0x4, scoped, tag = 'scoped memory for tpu_custom_call.1']
    #allocation5 [shape = 'u8[2048]{0}', space=vmem, size = 0x800, scoped, tag = 'output window, operand 0, single buffered']
    %7 = vsyncpa [#allocation3], 0
    %8 = vsyncpa [#allocation4], 0
    // Predicated region
    $region2: #{tpu_custom_call.1} parent=1 // pred_check
      _
    $region3: #{tpu_custom_call.1} parent=1 // pred_check_branch
      %10 = sbr.rel (0) target = $region5
    $region4: #{tpu_custom_call.1} parent=1 // pred_region
      %s12 = ssub.s32 64, 64
      %13 = vsyncadd [#allocation3], %s12
      %s14 = smul.addr %s6, 64
      %s15 = scalar_lea.hbm %s0, %s14
      %s17 = sshll.u32 [#allocation2], 4
      %s18 = int_to_ptr.vmem [resolvable:$true] %s17
      %20 = dma.hbm_to_vmem [thread:$0]  %s15, 64, %s18, [#allocation3]
    $region5: #{tpu_custom_call.1} parent=1 // pred_fallthru
      _
    // Predicated region
    $region6: #{tpu_custom_call.1} parent=1 // pred_check
      _
    $region7: #{tpu_custom_call.1} parent=1 // pred_check_branch
      %22 = sbr.rel (0) target = $region9
    $region8: #{tpu_custom_call.1} parent=1 // pred_region
      _
    $region9: #{tpu_custom_call.1} parent=1 // pred_fallthru
      _
    // Predicated region
    $region10: #{tpu_custom_call.1} parent=1 // pred_check
      _
    $region11: #{tpu_custom_call.1} parent=1 // pred_check_branch
      %24 = sbr.rel (0) target = $region13
    $region12: #{tpu_custom_call.1} parent=1 // pred_region
      %25 = dma.done [#allocation3], 64
    $region13: #{tpu_custom_call.1} parent=1 // pred_fallthru
      _
    %v26 = vld [vmem:[#allocation2] sm:$0xf]
    %v27 = vld [vmem:[%s1] sm:$0x1]
    %v29 = vlaneseq
    %v30 = vshrl.u32 %v29, 7
    %v31 = vsub.s32 0, %v30
    %v32 = vrot.slane %v27, %v31
    %v34 = vadd.f32 %v26, %v32
    %35 = vst [vmem:[#allocation5] sm:$0xf] %v34
    // Predicated region
    $region14: #{tpu_custom_call.1} parent=1 // pred_check
      _
    $region15: #{tpu_custom_call.1} parent=1 // pred_check_branch
      %37 = sbr.rel (0) target = $region17
    $region16: #{tpu_custom_call.1} parent=1 // pred_region
      %s39 = ssub.s32 64, 64
      %40 = vsyncadd [#allocation4], %s39
      %s41 = smul.addr %s6, 64
      %s42 = scalar_lea.hbm %s2, %s41
      %s44 = sshll.u32 [#allocation5], 4
      %s45 = int_to_ptr.vmem [resolvable:$true] %s44
      %47 = dma.vmem_to_hbm [thread:$0]  %s45, 64, %s42, [#allocation4]
    $region17: #{tpu_custom_call.1} parent=1 // pred_fallthru
      _
    // Predicated region
    $region18: #{tpu_custom_call.1} parent=1 // pred_check
      _
    $region19: #{tpu_custom_call.1} parent=1 // pred_check_branch
      %49 = sbr.rel (0) target = $region21
    $region20: #{tpu_custom_call.1} parent=1 // pred_region
      %50 = dma.done [#allocation4], 64
    $region21: #{tpu_custom_call.1} parent=1 // pred_fallthru
      _
    %51 = vsyncpa [#allocation3], 1
    %52 = vsyncpa [#allocation4], 1

// kernel: tpu_custom_call.1
$region0: #{tpu_custom_call.1}
  #allocation0 [shape = 'u32[]', space=smem, size = 0x4, offset = 0x4, fixed_abs, tag = 'smem constant byte address 0x4 - core index']
  #allocation1 [shape = 'u32[144,128]{1,0:T(1,128)}', space=vmem, size = 0x12000, scoped, tag = 'internal scratch']
  %s0 = inlined_call_operand.hbm [shape: f32[4,128], index: 0, kind: input, shape index: {}]
  %s1 = inlined_call_operand.vmem [shape: f32[1,128], index: 1, kind: input, shape index: {}]
  %s2 = inlined_call_operand.hbm [shape: f32[4,128], index: 2, kind: output, shape index: {}]
  %s3 = sld [smem:[#allocation0]]
  $region22: #{tpu_custom_call.1} parent=0
    _
  %s5 = ssub.s32 1, %s3
  %s6 = scalar_select 0, %s5, %s3
  $region1: #{tpu_custom_call.1} parent=0
    #allocation2 [shape = 'u8[2048]{0}', space=vmem, size = 0x800, scoped, tag = 'input window, operand 0, single buffered']
    #allocation3 [shape = 's32[1]{0}', space=sflag, size = 0x4, scoped, tag = 'scoped memory for tpu_custom_call.1']
    #allocation4 [shape = 's32[1]{0}', space=sflag, size = 0x4, scoped, tag = 'scoped memory for tpu_custom_call.1']
    #allocation5 [shape = 'u8[2048]{0}', space=vmem, size = 0x800, scoped, tag = 'output window, operand 0, single buffered']
    %7 = vsyncpa [#allocation3], 0
    %8 = vsyncpa [#allocation4], 0
    // Predicated region
    $region2: #{tpu_custom_call.1} parent=1 // pred_check
      _
    $region3: #{tpu_custom_call.1} parent=1 // pred_check_branch
      %10 = sbr.rel (0) target = $region5
    $region4: #{tpu_custom_call.1} parent=1 // pred_region
      %s12 = ssub.s32 64, 64
      %13 = vsyncadd [#allocation3], %s12
      %s15 = sshll.u32 [#allocation2], 4
      %s16 = int_to_ptr.vmem [resolvable:$true] %s15
      %18 = dma.hbm_to_vmem [thread:$0]  %s0, 64, %s16, [#allocation3]
    $region5: #{tpu_custom_call.1} parent=1 // pred_fallthru
      _
    // Predicated region
    $region6: #{tpu_custom_call.1} parent=1 // pred_check
      _
    $region7: #{tpu_custom_call.1} parent=1 // pred_check_branch
      %20 = sbr.rel (0) target = $region9
    $region8: #{tpu_custom_call.1} parent=1 // pred_region
      _
    $region9: #{tpu_custom_call.1} parent=1 // pred_fallthru
      _
    // Predicated region
    $region10: #{tpu_custom_call.1} parent=1 // pred_check
      _
    $region11: #{tpu_custom_call.1} parent=1 // pred_check_branch
      %22 = sbr.rel (0) target = $region13
    $region12: #{tpu_custom_call.1} parent=1 // pred_region
      %23 = dma.done [#allocation3], 64
    $region13: #{tpu_custom_call.1} parent=1 // pred_fallthru
      _
    %v24 = vld [vmem:[#allocation2] sm:$0xf]
    %v25 = vld [vmem:[%s1] sm:$0x1]
    %v27 = vlaneseq
    %v28 = vshrl.u32 %v27, 7
    %v29 = vsub.s32 0, %v28
    %v30 = vrot.slane %v25, %v29
    %v32 = vadd.f32 %v24, %v30
    %33 = vst [vmem:[#allocation5] sm:$0xf] %v32
    // Predicated region
    $region14: #{tpu_custom_call.1} parent=1 // pred_check
      _
    $region15: #{tpu_custom_call.1} parent=1 // pred_check_branch
      %35 = sbr.rel (0) target = $region17
    $region16: #{tpu_custom_call.1} parent=1 // pred_region
      %s37 = ssub.s32 64, 64
      %38 = vsyncadd [#allocation4], %s37
      %s40 = sshll.u32 [#allocation5], 4
      %s41 = int_to_ptr.vmem [resolvable:$true] %s40
      %43 = dma.vmem_to_hbm [thread:$0]  %s41, 64, %s2, [#allocation4]
    $region17: #{tpu_custom_call.1} parent=1 // pred_fallthru
      _
    // Predicated region
    $region18: #{tpu_custom_call.1} parent=1 // pred_check
      _
    $region19: #{tpu_custom_call.1} parent=1 // pred_check_branch
      %45 = sbr.rel (0) target = $region21
    $region20: #{tpu_custom_call.1} parent=1 // pred_region
      %46 = dma.done [#allocation4], 64
    $region21: #{tpu_custom_call.1} parent=1 // pred_fallthru
      _
    %47 = vsyncpa [#allocation3], 1
    %48 = vsyncpa [#allocation4], 1

</llo_original>
